<compile_context>
chip_gen: v7x
topology: tpu7x:2x2x1
jax: 0.10.0
libtpu: 0.0.40
codegen_flags: <defaults>
</compile_context>

<pallas_src>
import functools

import jax
import jax.numpy as jnp
from jax.experimental import pallas as pl
from jax.experimental.pallas import tpu as pltpu


def _cdiv(a, b):
    return -(-a // b)


def _project3d_kernel(p_ref, pts_ref, out_ref, *, eps):
    """p_ref: SMEM (B, 12) folded projection (scale already applied to rows 0/1).
    pts_ref: VMEM (4, 8, TNS) homogeneous points, sublane-dense view.
    out_ref: VMEM (2, 8, TNS) normalized pixel coords."""
    b = pl.program_id(0)

    x = pts_ref[0]          # (8, TNS)
    y = pts_ref[1]
    z = pts_ref[2]
    w = pts_ref[3]

    # Depth row first so the reciprocal overlaps the remaining FMAs.
    cam_z = (p_ref[b, 8] * x + p_ref[b, 9] * y
             + p_ref[b, 10] * z + p_ref[b, 11] * w)
    inv_z = pl.reciprocal(cam_z + eps, approx=False)

    cam_x = (p_ref[b, 0] * x + p_ref[b, 1] * y
             + p_ref[b, 2] * z + p_ref[b, 3] * w)
    cam_y = (p_ref[b, 4] * x + p_ref[b, 5] * y
             + p_ref[b, 6] * z + p_ref[b, 7] * w)

    # Scale was folded into P rows 0/1, so the epilogue is a mul and a sub.
    out_ref[0] = cam_x * inv_z - 1.0
    out_ref[1] = cam_y * inv_z - 1.0


def project3d(points, K, T, *, height, width, eps=1e-7, channels_last=True,
              max_points_per_tile=262144, vmem_limit_bytes=32 * 1024 * 1024):
    """points: (B, 4, N) homogeneous points, K/T: (B, 4, 4).  N = H*W.

    channels_last=True returns the PyTorch layout (B, H, W, 2) (one extra HBM
    transpose pass in XLA); channels_last=False returns (B, 2, H, W) directly.
    """
    B, four, N = points.shape
    assert four == 4 and N == height * width
    points = points.astype(jnp.float32)

    # Fold intrinsics/extrinsics AND the pixel-normalization scale once:
    #   out = (2/(dim-1)) * cam_xy / (cam_z + eps) - 1
    # so scale rows 0/1 of P = (K @ T)[:, :3, :] by 2/(W-1), 2/(H-1).
    P = jnp.matmul(K.astype(jnp.float32), T.astype(jnp.float32))[:, :3, :]
    row_scale = jnp.array([2.0 / (width - 1), 2.0 / (height - 1), 1.0],
                          jnp.float32)
    P = (P * row_scale[None, :, None]).reshape(B, 12)

    # Sublane-dense view of the point cloud: (B, 4, N) -> (B, 4, 8, N/8).
    # Contiguous reshape (free); pad N to a multiple of 8 if needed.
    n_pad = (-N) % 8
    if n_pad:
        points = jnp.pad(points, ((0, 0), (0, 0), (0, n_pad)))
    Np = N + n_pad
    N8 = Np // 8
    pts = points.reshape(B, 4, 8, N8)

    # Lane tile (in lanes; 8 points per lane).  Multiple of 128 or full dim.
    max_tns = max(128, (max_points_per_tile // 8) // 128 * 128)
    if N8 <= max_tns:
        tns = N8
        n_tiles = 1
    else:
        tns = max_tns
        n_tiles = _cdiv(N8, tns)

    # v7x megacore: keep the total grid-step count even (both TCs busy) when
    # it would otherwise be odd and the lane axis is splittable.
    if (B * n_tiles) % 2 == 1 and N8 >= 256:
        tns2 = ((_cdiv(N8, n_tiles + 1) + 127) // 128) * 128
        if 128 <= tns2 < N8:
            tns = tns2
            n_tiles = _cdiv(N8, tns)

    kernel = functools.partial(_project3d_kernel, eps=float(eps))

    out = pl.pallas_call(
        kernel,
        out_shape=jax.ShapeDtypeStruct((B, 2, 8, N8), jnp.float32),
        grid=(B, n_tiles),
        in_specs=[
            # Whole (B, 12) P lives in SMEM; kernel reads 12 scalars per step.
            pl.BlockSpec(memory_space=pltpu.MemorySpace.SMEM),
            pl.BlockSpec((None, 4, 8, tns), lambda b, n: (b, 0, 0, n)),
        ],
        out_specs=pl.BlockSpec((None, 2, 8, tns), lambda b, n: (b, 0, 0, n)),
        compiler_params=pltpu.CompilerParams(
            dimension_semantics=("parallel", "parallel"),
            vmem_limit_bytes=vmem_limit_bytes),
    )(P, pts)

    out = out.reshape(B, 2, Np)
    if n_pad:
        out = out[:, :, :N]
    out = out.reshape(B, 2, height, width)
    if channels_last:
        # PyTorch layout (B, H, W, 2): extra HBM pass in XLA; consumers that
        # accept channels-first should pass channels_last=False to skip it.
        out = out.transpose(0, 2, 3, 1)
    return out


def project3d_ref(points, K, T, *, height, width, eps=1e-7):
    """Pure-JAX reference mirroring the PyTorch forward (returns (B,H,W,2))."""
    B = points.shape[0]
    P = jnp.matmul(K, T)[:, :3, :]
    cam = jnp.matmul(P, points)
    pix = cam[:, :2, :] / (cam[:, 2:3, :] + eps)
    pix = pix.reshape(B, 2, height, width).transpose(0, 2, 3, 1)
    pix = pix / jnp.array([width - 1.0, height - 1.0], jnp.float32)
    return (pix - 0.5) * 2.0


def _run_case(B, H, W, key, **kw):
    N = H * W
    k1, k2 = jax.random.split(key)

    # Homogeneous 3D points: random xyz, z pushed away from 0, w = 1.
    xyz = jax.random.uniform(k1, (B, 3, N), jnp.float32, minval=-1.0, maxval=1.0)
    xyz = xyz.at[:, 2, :].add(3.0)
    points = jnp.concatenate([xyz, jnp.ones((B, 1, N), jnp.float32)], axis=1)

    # Deterministic intrinsics K and perturbed-identity extrinsics T.
    K_base = jnp.array(
        [[0.58 * W, 0.0, 0.5 * W, 0.0],
         [0.0, 1.92 * H, 0.5 * H, 0.0],
         [0.0, 0.0, 1.0, 0.0],
         [0.0, 0.0, 0.0, 1.0]], jnp.float32)
    Kmat = jnp.broadcast_to(K_base, (B, 4, 4))
    Tmat = (jnp.eye(4, dtype=jnp.float32)[None]
            + 0.05 * jax.random.normal(k2, (B, 4, 4), jnp.float32))

    ref = project3d_ref(points, Kmat, Tmat, height=H, width=W)

    # PyTorch layout (channels_last=True, default).
    out = jax.block_until_ready(
        project3d(points, Kmat, Tmat, height=H, width=W, **kw))
    assert out.shape == (B, H, W, 2), out.shape
    assert jnp.allclose(out, ref, atol=1e-4, rtol=1e-4), float(
        jnp.max(jnp.abs(out - ref)))

    # Channels-first path (skips the wrapper transpose / extra HBM pass).
    out_cf = jax.block_until_ready(
        project3d(points, Kmat, Tmat, height=H, width=W,
                  channels_last=False, **kw))
    ref_cf = jnp.transpose(ref, (0, 3, 1, 2))
    assert out_cf.shape == (B, 2, H, W), out_cf.shape
    assert jnp.allclose(out_cf, ref_cf, atol=1e-4, rtol=1e-4), float(
        jnp.max(jnp.abs(out_cf - ref_cf)))


if __name__ == "__main__":
    key = jax.random.PRNGKey(0)
    k1, k2 = jax.random.split(key)

    # 1) small image, single lane tile (TNS == N/8).
    _run_case(2, 16, 16, k1)

    # 2) larger image with a small tile cap to exercise the multi-tile path
    #    (N=2048 points -> N8=256 lanes -> two 128-lane tiles).
    _run_case(2, 32, 64, k2, max_points_per_tile=1024)

    print("KERNEL_OK")
</pallas_src>

<mosaic_0001>
module attributes {stable_mosaic.version = 11 : i64} {
  func.func @_project3d_kernel(%arg0: i32, %arg1: i32, %arg2: memref<2x12xf32, #tpu.memory_space<smem>>, %arg3: memref<1x4x8x32xf32, #tpu.memory_space<vmem>>, %arg4: memref<1x2x8x32xf32, #tpu.memory_space<vmem>>) attributes {dimension_semantics = [#tpu.dimension_semantics<parallel>, #tpu.dimension_semantics<parallel>], iteration_bounds = array<i64: 2, 1>, scalar_prefetch = 0 : i64, scratch_operands = 0 : i64, tpu.core_type = #tpu.core_type<tc>, window_params = [{transform_indices = @transform_0, window_bounds = array<i64: 2, 12>}, {transform_indices = @transform_1, window_bounds = array<i64: 1, 4, 8, 32>}, {transform_indices = @transform_2, window_bounds = array<i64: 1, 2, 8, 32>}]} {
    %c0 = arith.constant 0 : index
    %c0_0 = arith.constant 0 : index
    %c0_1 = arith.constant 0 : index
    %c0_2 = arith.constant 0 : index
    %0 = vector.load %arg3[%c0, %c0_0, %c0_1, %c0_2] : memref<1x4x8x32xf32, #tpu.memory_space<vmem>>, vector<1x1x8x32xf32>
    %1 = vector.shape_cast %0 : vector<1x1x8x32xf32> to vector<8x32xf32>
    %c0_3 = arith.constant 0 : index
    %c1 = arith.constant 1 : index
    %c0_4 = arith.constant 0 : index
    %c0_5 = arith.constant 0 : index
    %2 = vector.load %arg3[%c0_3, %c1, %c0_4, %c0_5] : memref<1x4x8x32xf32, #tpu.memory_space<vmem>>, vector<1x1x8x32xf32>
    %3 = vector.shape_cast %2 : vector<1x1x8x32xf32> to vector<8x32xf32>
    %c0_6 = arith.constant 0 : index
    %c2 = arith.constant 2 : index
    %c0_7 = arith.constant 0 : index
    %c0_8 = arith.constant 0 : index
    %4 = vector.load %arg3[%c0_6, %c2, %c0_7, %c0_8] : memref<1x4x8x32xf32, #tpu.memory_space<vmem>>, vector<1x1x8x32xf32>
    %5 = vector.shape_cast %4 : vector<1x1x8x32xf32> to vector<8x32xf32>
    %c0_9 = arith.constant 0 : index
    %c3 = arith.constant 3 : index
    %c0_10 = arith.constant 0 : index
    %c0_11 = arith.constant 0 : index
    %6 = vector.load %arg3[%c0_9, %c3, %c0_10, %c0_11] : memref<1x4x8x32xf32, #tpu.memory_space<vmem>>, vector<1x1x8x32xf32>
    %7 = vector.shape_cast %6 : vector<1x1x8x32xf32> to vector<8x32xf32>
    %8 = arith.index_cast %arg0 : i32 to index
    %c8 = arith.constant 8 : index
    %9 = memref.load %arg2[%8, %c8] : memref<2x12xf32, #tpu.memory_space<smem>>
    %10 = vector.broadcast %9 : f32 to vector<8x32xf32>
    %11 = arith.mulf %10, %1 : vector<8x32xf32>
    %12 = arith.index_cast %arg0 : i32 to index
    %c9 = arith.constant 9 : index
    %13 = memref.load %arg2[%12, %c9] : memref<2x12xf32, #tpu.memory_space<smem>>
    %14 = vector.broadcast %13 : f32 to vector<8x32xf32>
    %15 = arith.mulf %14, %3 : vector<8x32xf32>
    %16 = arith.addf %11, %15 : vector<8x32xf32>
    %17 = arith.index_cast %arg0 : i32 to index
    %c10 = arith.constant 10 : index
    %18 = memref.load %arg2[%17, %c10] : memref<2x12xf32, #tpu.memory_space<smem>>
    %19 = vector.broadcast %18 : f32 to vector<8x32xf32>
    %20 = arith.mulf %19, %5 : vector<8x32xf32>
    %21 = arith.addf %16, %20 : vector<8x32xf32>
    %22 = arith.index_cast %arg0 : i32 to index
    %c11 = arith.constant 11 : index
    %23 = memref.load %arg2[%22, %c11] : memref<2x12xf32, #tpu.memory_space<smem>>
    %24 = vector.broadcast %23 : f32 to vector<8x32xf32>
    %25 = arith.mulf %24, %7 : vector<8x32xf32>
    %26 = arith.addf %21, %25 : vector<8x32xf32>
    %cst = arith.constant 1.000000e-07 : f32
    %27 = vector.broadcast %cst : f32 to vector<8x32xf32>
    %28 = arith.addf %26, %27 : vector<8x32xf32>
    %29 = tpu.reciprocal %28 : vector<8x32xf32> -> vector<8x32xf32>
    %30 = arith.index_cast %arg0 : i32 to index
    %c0_12 = arith.constant 0 : index
    %31 = memref.load %arg2[%30, %c0_12] : memref<2x12xf32, #tpu.memory_space<smem>>
    %32 = vector.broadcast %31 : f32 to vector<8x32xf32>
    %33 = arith.mulf %32, %1 : vector<8x32xf32>
    %34 = arith.index_cast %arg0 : i32 to index
    %c1_13 = arith.constant 1 : index
    %35 = memref.load %arg2[%34, %c1_13] : memref<2x12xf32, #tpu.memory_space<smem>>
    %36 = vector.broadcast %35 : f32 to vector<8x32xf32>
    %37 = arith.mulf %36, %3 : vector<8x32xf32>
    %38 = arith.addf %33, %37 : vector<8x32xf32>
    %39 = arith.index_cast %arg0 : i32 to index
    %c2_14 = arith.constant 2 : index
    %40 = memref.load %arg2[%39, %c2_14] : memref<2x12xf32, #tpu.memory_space<smem>>
    %41 = vector.broadcast %40 : f32 to vector<8x32xf32>
    %42 = arith.mulf %41, %5 : vector<8x32xf32>
    %43 = arith.addf %38, %42 : vector<8x32xf32>
    %44 = arith.index_cast %arg0 : i32 to index
    %c3_15 = arith.constant 3 : index
    %45 = memref.load %arg2[%44, %c3_15] : memref<2x12xf32, #tpu.memory_space<smem>>
    %46 = vector.broadcast %45 : f32 to vector<8x32xf32>
    %47 = arith.mulf %46, %7 : vector<8x32xf32>
    %48 = arith.addf %43, %47 : vector<8x32xf32>
    %49 = arith.index_cast %arg0 : i32 to index
    %c4 = arith.constant 4 : index
    %50 = memref.load %arg2[%49, %c4] : memref<2x12xf32, #tpu.memory_space<smem>>
    %51 = vector.broadcast %50 : f32 to vector<8x32xf32>
    %52 = arith.mulf %51, %1 : vector<8x32xf32>
    %53 = arith.index_cast %arg0 : i32 to index
    %c5 = arith.constant 5 : index
    %54 = memref.load %arg2[%53, %c5] : memref<2x12xf32, #tpu.memory_space<smem>>
    %55 = vector.broadcast %54 : f32 to vector<8x32xf32>
    %56 = arith.mulf %55, %3 : vector<8x32xf32>
    %57 = arith.addf %52, %56 : vector<8x32xf32>
    %58 = arith.index_cast %arg0 : i32 to index
    %c6 = arith.constant 6 : index
    %59 = memref.load %arg2[%58, %c6] : memref<2x12xf32, #tpu.memory_space<smem>>
    %60 = vector.broadcast %59 : f32 to vector<8x32xf32>
    %61 = arith.mulf %60, %5 : vector<8x32xf32>
    %62 = arith.addf %57, %61 : vector<8x32xf32>
    %63 = arith.index_cast %arg0 : i32 to index
    %c7 = arith.constant 7 : index
    %64 = memref.load %arg2[%63, %c7] : memref<2x12xf32, #tpu.memory_space<smem>>
    %65 = vector.broadcast %64 : f32 to vector<8x32xf32>
    %66 = arith.mulf %65, %7 : vector<8x32xf32>
    %67 = arith.addf %62, %66 : vector<8x32xf32>
    %68 = arith.mulf %48, %29 : vector<8x32xf32>
    %cst_16 = arith.constant 1.000000e+00 : f32
    %69 = vector.broadcast %cst_16 : f32 to vector<8x32xf32>
    %70 = arith.subf %68, %69 : vector<8x32xf32>
    %c0_17 = arith.constant 0 : index
    %c0_18 = arith.constant 0 : index
    %c0_19 = arith.constant 0 : index
    %c0_20 = arith.constant 0 : index
    %71 = vector.load %arg4[%c0_17, %c0_18, %c0_19, %c0_20] : memref<1x2x8x32xf32, #tpu.memory_space<vmem>>, vector<1x1x8x32xf32>
    %72 = vector.shape_cast %71 : vector<1x1x8x32xf32> to vector<8x32xf32>
    %73 = vector.shape_cast %70 : vector<8x32xf32> to vector<1x1x8x32xf32>
    tpu.vector_store %arg4[%c0_17, %c0_18, %c0_19, %c0_20], %73 {strides = array<i32>} : memref<1x2x8x32xf32, #tpu.memory_space<vmem>>, vector<1x1x8x32xf32>,
    %74 = arith.mulf %67, %29 : vector<8x32xf32>
    %cst_21 = arith.constant 1.000000e+00 : f32
    %75 = vector.broadcast %cst_21 : f32 to vector<8x32xf32>
    %76 = arith.subf %74, %75 : vector<8x32xf32>
    %c0_22 = arith.constant 0 : index
    %c1_23 = arith.constant 1 : index
    %c0_24 = arith.constant 0 : index
    %c0_25 = arith.constant 0 : index
    %77 = vector.load %arg4[%c0_22, %c1_23, %c0_24, %c0_25] : memref<1x2x8x32xf32, #tpu.memory_space<vmem>>, vector<1x1x8x32xf32>
    %78 = vector.shape_cast %77 : vector<1x1x8x32xf32> to vector<8x32xf32>
    %79 = vector.shape_cast %76 : vector<8x32xf32> to vector<1x1x8x32xf32>
    tpu.vector_store %arg4[%c0_22, %c1_23, %c0_24, %c0_25], %79 {strides = array<i32>} : memref<1x2x8x32xf32, #tpu.memory_space<vmem>>, vector<1x1x8x32xf32>,
    return
  }
  func.func @transform_0(%arg0: i32, %arg1: i32) -> (i32, i32) {
    %c0_i32 = arith.constant 0 : i32
    %c0_i32_0 = arith.constant 0 : i32
    %c0_i32_1 = arith.constant 0 : i32
    return %c0_i32, %c0_i32_0 : i32, i32
  }
  func.func @transform_1(%arg0: i32, %arg1: i32) -> (i32, i32, i32, i32) {
    %c0_i32 = arith.constant 0 : i32
    %c0_i32_0 = arith.constant 0 : i32
    %c0_i32_1 = arith.constant 0 : i32
    return %arg0, %c0_i32, %c0_i32_0, %arg1 : i32, i32, i32, i32
  }
  func.func @transform_2(%arg0: i32, %arg1: i32) -> (i32, i32, i32, i32) {
    %c0_i32 = arith.constant 0 : i32
    %c0_i32_0 = arith.constant 0 : i32
    %c0_i32_1 = arith.constant 0 : i32
    return %arg0, %c0_i32, %c0_i32_0, %arg1 : i32, i32, i32, i32
  }
}

</mosaic_0001>

<llo_original>
// kernel: tpu_custom_call.1
$region0: #{tpu_custom_call.1}
  #allocation0 [shape = 'u32[]', space=smem, size = 0x4, offset = 0x4, fixed_abs, tag = 'smem constant byte address 0x4 - core index']
  #allocation1 [shape = 'u32[144,128]{1,0:T(1,128)}', space=vmem, size = 0x12000, scoped, tag = 'internal scratch']
  %s0 = inlined_call_operand.hbm [shape: f32[2,12], index: 0, kind: input, shape index: {}]
  %s1 = inlined_call_operand.hbm [shape: f32[2,4,8,32], index: 1, kind: input, shape index: {}]
  %s2 = inlined_call_operand.hbm [shape: f32[2,2,8,32], index: 2, kind: output, shape index: {}]
  %s3 = sld [smem:[#allocation0]]
  $region49: #{tpu_custom_call.1} parent=0
    _
  %s5 = ssub.s32 1, %s3
  %s6 = scalar_select 0, %s5, %s3
  $region1: #{tpu_custom_call.1} parent=0
    #allocation2 [shape = 'u8[1024]{0}', space=smem, size = 0x400, scoped, tag = 'input window, operand 0, single buffered']
    #allocation3 [shape = 's32[2]{0}', space=sflag, size = 0x8, scoped, tag = 'scoped memory for tpu_custom_call.1']
    #allocation4 [shape = 's32[2]{0}', space=sflag, size = 0x8, scoped, tag = 'scoped memory for tpu_custom_call.1']
    #allocation5 [shape = 's32[2]{0}', space=sflag, size = 0x8, scoped, tag = 'scoped memory for tpu_custom_call.1']
    #allocation6 [shape = 'u8[32768]{0}', space=vmem, size = 0x8000, scoped, tag = 'input window, operand 1']
    #allocation7 [shape = 'u8[16384]{0}', space=vmem, size = 0x4000, scoped, tag = 'output window, operand 0']
    %7 = vsyncpa [#allocation5], 0
    %8 = vsyncpa [#allocation3], 0
    %s9 = scalar_lea.sflag [#allocation3], 1
    %10 = vsyncpa %s9, 0
    %11 = vsyncpa [#allocation4], 0
    %s12 = scalar_lea.sflag [#allocation4], 1
    %13 = vsyncpa %s12, 0
    loop: start=0, step=1, limit=4
    $region2: #{tpu_custom_call.1} parent=1 // loop_pre_header
      _
    $region3: #{tpu_custom_call.1} parent=1 // loop_header
      %s15 = sphi 0, %s19
      %p16 = scmp.ge.s32.totalorder %s15, 4
      %s22 = sphi 0, %s34
      %s23 = sphi 0, %s30
      %s24 = sphi 0, %s22
      %s25 = sphi 0, %s23
      %s26 = sphi 0, %s24
      %s27 = sphi 0, %s25
      %s35 = sphi 0, %s35
      %s37 = sphi 0, %s35
      %s38 = sphi 0, %s37
      %s52 = sphi 0, %s38
      %s60 = sphi 0, %s62
      %s63 = sphi 0, %s60
      %s64 = sphi 0, %s63
      %s80 = sphi 0, %s64
      %s88 = sphi 0, %s90
      %s91 = sphi 0, %s88
      %s92 = sphi 0, %s91
      %s108 = sphi 0, %s92
    $region4: #{tpu_custom_call.1} parent=1 // loop_header_branch
      %18 = sbr.rel (%p16) target = $region8
    $region5: #{tpu_custom_call.1} parent=1 // loop_body
      %s20 = ssub.s32 %s15, 1
      %s21 = ssub.s32 %s15, 2
      %s28 = sadd.s32 1, %s23
      %p29 = scmp.ge.s32.totalorder %s28, 1
      %s30 = scalar_select %p29, 0, %s28
      %s31 = sadd.s32 1, %s22
      %s32 = scalar_select %p29, %s31, %s22
      %p33 = scmp.ge.s32.totalorder %s32, 2
      %s34 = scalar_select %p33, 0, %s32
      %s36 = sadd.s32 %s35, 1
      %p39 = scmp.eq.s32.totalorder %s15, 1
      %p40 = scmp.ne.s32.totalorder %s35, %s37
      %p41 = scmp.eq.s32.totalorder %s15, 0
      %p42 = por %p40, %p41
      %p43 = scmp.ne.s32.totalorder %s35, %s37
      %p44 = scmp.eq.s32.totalorder %s20, 1
      %p45 = por %p43, %p44
      %p46 = scmp.ne.s32.totalorder %s37, %s38
      %p47 = scmp.eq.s32.totalorder %s20, 0
      %p48 = por %p46, %p47
      %p49 = scmp.ne.s32.totalorder %s37, %s38
      %p50 = scmp.eq.s32.totalorder %s21, 1
      %p51 = por %p49, %p50
      %p53 = scmp.ne.s32.totalorder %s38, %s52
      %p54 = scmp.eq.s32.totalorder %s21, 0
      %p55 = por %p53, %p54
      %s56 = ssub.s32 %s22, %s34
      %s57 = ssub.s32 %s23, %s30
      %s58 = sor.u32 %s56, %s57
      %p59 = scmp.eq.s32.totalorder %s58, 0
      %s61 = sadd.s32 %s60, 1
      %s62 = scalar_select %p59, %s60, %s61
      %p65 = pneg %p59
      %p66 = scmp.eq.s32.totalorder %s15, 1
      %p67 = por %p65, %p66
      %p68 = scmp.ne.s32.totalorder %s60, %s63
      %p69 = scmp.eq.s32.totalorder %s15, 0
      %p70 = por %p68, %p69
      %p71 = scmp.ne.s32.totalorder %s60, %s63
      %p72 = scmp.eq.s32.totalorder %s20, 1
      %p73 = por %p71, %p72
      %p74 = scmp.ne.s32.totalorder %s63, %s64
      %p75 = scmp.eq.s32.totalorder %s20, 0
      %p76 = por %p74, %p75
      %p77 = scmp.ne.s32.totalorder %s63, %s64
      %p78 = scmp.eq.s32.totalorder %s21, 1
      %p79 = por %p77, %p78
      %p81 = scmp.ne.s32.totalorder %s64, %s80
      %p82 = scmp.eq.s32.totalorder %s21, 0
      %p83 = por %p81, %p82
      %s84 = ssub.s32 %s22, %s34
      %s85 = ssub.s32 %s23, %s30
      %s86 = sor.u32 %s84, %s85
      %p87 = scmp.eq.s32.totalorder %s86, 0
      %s89 = sadd.s32 %s88, 1
      %s90 = scalar_select %p87, %s88, %s89
      %p93 = pneg %p87
      %p94 = scmp.eq.s32.totalorder %s15, 1
      %p95 = por %p93, %p94
      %p96 = scmp.ne.s32.totalorder %s88, %s91
      %p97 = scmp.eq.s32.totalorder %s15, 0
      %p98 = por %p96, %p97
      %p99 = scmp.ne.s32.totalorder %s88, %s91
      %p100 = scmp.eq.s32.totalorder %s20, 1
      %p101 = por %p99, %p100
      %p102 = scmp.ne.s32.totalorder %s91, %s92
      %p103 = scmp.eq.s32.totalorder %s20, 0
      %p104 = por %p102, %p103
      %p105 = scmp.ne.s32.totalorder %s91, %s92
      %p106 = scmp.eq.s32.totalorder %s21, 1
      %p107 = por %p105, %p106
      %p109 = scmp.ne.s32.totalorder %s92, %s108
      %p110 = scmp.eq.s32.totalorder %s21, 0
      %p111 = por %p109, %p110
      %p112 = scmp.le.s32.totalorder 1, %s15
      %p113 = scmp.lt.s32.totalorder %s15, 3
      %p114 = pnand %p112, %p113
      %p115 = pneg %p114
      // Predicated region
      $region9: #{tpu_custom_call.1} parent=5 // pred_check
        _
      $region10: #{tpu_custom_call.1} parent=5 // pred_check_branch
        %117 = sbr.rel (%p114) target = $region12
      $region11: #{tpu_custom_call.1} parent=5 // pred_region
        %s118 = ssub.s32 %s15, 1
        // Predicated region
        $region13: #{tpu_custom_call.1} parent=11 // pred_check
          %p119 = pneg %p48
        $region14: #{tpu_custom_call.1} parent=11 // pred_check_branch
          %121 = sbr.rel (%p119) target = $region16
        $region15: #{tpu_custom_call.1} parent=11 // pred_region
          %s123 = ssub.s32 32, 32
          %124 = vsyncadd [#allocation5], %s123
          %127 = dma.hbm_to_smem %s0, 32, [#allocation2], [#allocation5]
        $region16: #{tpu_custom_call.1} parent=11 // pred_fallthru
          _
      $region12: #{tpu_custom_call.1} parent=5 // pred_fallthru
        _
      %p128 = scmp.lt.s32.totalorder %s15, 2
      // Predicated region
      $region17: #{tpu_custom_call.1} parent=5 // pred_check
        %p129 = pneg %p128
      $region18: #{tpu_custom_call.1} parent=5 // pred_check_branch
        %131 = sbr.rel (%p129) target = $region20
      $region19: #{tpu_custom_call.1} parent=5 // pred_region
        // Predicated region
        $region21: #{tpu_custom_call.1} parent=19 // pred_check
          %p132 = pneg %p70
        $region22: #{tpu_custom_call.1} parent=19 // pred_check_branch
          %134 = sbr.rel (%p132) target = $region24
        $region23: #{tpu_custom_call.1} parent=19 // pred_region
          %s135 = sand.u32 %s60, 1
          %s136 = scalar_lea.sflag [#allocation3], %s135
          %s137 = sand.u32 %s60, 1
          %s138 = smul.addr %s137, 32
          %s139 = scalar_lea.vmem [#allocation6], %s138
          %s141 = ssub.s32 512, 512
          %142 = vsyncadd %s136, %s141
          %s143 = smul.addr %s22, 4
          %s144 = sadd.s32 %s23, %s143
          %s145 = smul.addr %s144, 128
          %s146 = scalar_lea.hbm %s1, %s145
          %s147 = sshll.u32 %s139, 4
          %s148 = int_to_ptr.vmem [resolvable:$true] %s147
          %153 = dma.hbm_to_vmem [thread:$0]  %s146, 512, %s148, %s136, 128, 128, 8
        $region24: #{tpu_custom_call.1} parent=19 // pred_fallthru
          _
      $region20: #{tpu_custom_call.1} parent=5 // pred_fallthru
        _
      %p154 = scmp.le.s32.totalorder 1, %s15
      %p155 = scmp.lt.s32.totalorder %s15, 3
      %p156 = pnand %p154, %p155
      %p157 = pneg %p156
      // Predicated region
      $region25: #{tpu_custom_call.1} parent=5 // pred_check
        _
      $region26: #{tpu_custom_call.1} parent=5 // pred_check_branch
        %159 = sbr.rel (%p156) target = $region28
      $region27: #{tpu_custom_call.1} parent=5 // pred_region
        %s160 = ssub.s32 %s15, 1
        // Predicated region
        $region29: #{tpu_custom_call.1} parent=27 // pred_check
          %p161 = pneg %p48
        $region30: #{tpu_custom_call.1} parent=27 // pred_check_branch
          %163 = sbr.rel (%p161) target = $region32
        $region31: #{tpu_custom_call.1} parent=27 // pred_region
          %164 = dma.done [#allocation5], 32
        $region32: #{tpu_custom_call.1} parent=27 // pred_fallthru
          _
        %s165 = sand.u32 %s63, 1
        %s166 = scalar_lea.sflag [#allocation3], %s165
        %s167 = sand.u32 %s63, 1
        %s168 = smul.addr %s167, 32
        %s169 = scalar_lea.vmem [#allocation6], %s168
        // Predicated region
        $region33: #{tpu_custom_call.1} parent=27 // pred_check
          %p170 = pneg %p76
        $region34: #{tpu_custom_call.1} parent=27 // pred_check_branch
          %172 = sbr.rel (%p170) target = $region36
        $region35: #{tpu_custom_call.1} parent=27 // pred_region
          %173 = dma.done %s166, 512
        $region36: #{tpu_custom_call.1} parent=27 // pred_fallthru
          _
        %174 = sfence
        %p175 = pneg %p48
        %p176 = pneg %p45
        %s177 = sand.u32 %s63, 1
        %s178 = scalar_lea.sflag [#allocation3], %s177
        %s179 = sand.u32 %s63, 1
        %s180 = smul.addr %s179, 32
        %s181 = scalar_lea.vmem [#allocation6], %s180
        %p182 = pneg %p76
        %p183 = pneg %p73
        %p184 = pneg %p104
        %p185 = pneg %p101
        %s186 = sand.u32 %s91, 1
        %s187 = scalar_lea.sflag [#allocation4], %s186
        %s188 = sand.u32 %s91, 1
        %s189 = smul.addr %s188, 16
        %s190 = scalar_lea.vmem [#allocation7], %s189
        %v191 = vld [vmem:[%s169] sm:$0xff]
        %s192 = scalar_lea.vmem %s169, 8 [#allocation6]
        %v193 = vld [vmem:[%s192] sm:$0xff]
        %s194 = scalar_lea.vmem %s169, 16 [#allocation6]
        %v195 = vld [vmem:[%s194] sm:$0xff]
        %s196 = scalar_lea.vmem %s169, 24 [#allocation6]
        %v197 = vld [vmem:[%s196] sm:$0xff]
        %s198 = smul.u32 %s24, 128
        %s199 = sadd.s32 %s198, 8
        %s200 = sld [smem:[#allocation2 + %s199]]
        %v201 = vstv %s200
        %v202 = vmul.f32 %v201, %v191
        %s203 = sadd.s32 %s198, 9
        %s204 = sld [smem:[#allocation2 + %s203]]
        %v205 = vstv %s204
        %v206 = vmul.f32 %v205, %v193
        %v207 = vadd.f32 %v202, %v206
        %s208 = sadd.s32 %s198, 10
        %s209 = sld [smem:[#allocation2 + %s208]]
        %v210 = vstv %s209
        %v211 = vmul.f32 %v210, %v195
        %v212 = vadd.f32 %v207, %v211
        %s213 = sadd.s32 %s198, 11
        %s214 = sld [smem:[#allocation2 + %s213]]
        %v215 = vstv %s214
        %v216 = vmul.f32 %v215, %v197
        %v217 = vadd.f32 %v212, %v216
        %v218 = vadd.f32 %v217, 1e-07
        %v219 = vrcp.pop %v218
        %s220 = sld [smem:[#allocation2 + %s198]]
        %v221 = vstv %s220
        %v222 = vmul.f32 %v221, %v191
        %s223 = sadd.s32 %s198, 1
        %s224 = sld [smem:[#allocation2 + %s223]]
        %v225 = vstv %s224
        %v226 = vmul.f32 %v225, %v193
        %v227 = vadd.f32 %v222, %v226
        %s228 = sadd.s32 %s198, 2
        %s229 = sld [smem:[#allocation2 + %s228]]
        %v230 = vstv %s229
        %v231 = vmul.f32 %v230, %v195
        %v232 = vadd.f32 %v227, %v231
        %s233 = sadd.s32 %s198, 3
        %s234 = sld [smem:[#allocation2 + %s233]]
        %v235 = vstv %s234
        %v236 = vmul.f32 %v235, %v197
        %v237 = vadd.f32 %v232, %v236
        %s238 = sadd.s32 %s198, 4
        %s239 = sld [smem:[#allocation2 + %s238]]
        %v240 = vstv %s239
        %v241 = vmul.f32 %v240, %v191
        %s242 = sadd.s32 %s198, 5
        %s243 = sld [smem:[#allocation2 + %s242]]
        %v244 = vstv %s243
        %v245 = vmul.f32 %v244, %v193
        %v246 = vadd.f32 %v241, %v245
        %s247 = sadd.s32 %s198, 6
        %s248 = sld [smem:[#allocation2 + %s247]]
        %v249 = vstv %s248
        %v250 = vmul.f32 %v249, %v195
        %v251 = vadd.f32 %v246, %v250
        %s252 = sadd.s32 %s198, 7
        %s253 = sld [smem:[#allocation2 + %s252]]
        %v254 = vstv %s253
        %v255 = vmul.f32 %v254, %v197
        %v256 = vadd.f32 %v251, %v255
        %v257 = vmul.f32 %v237, %v219
        %v258 = vsub.f32 %v257, 1.0
        %vm259 = vcmask 261120
        %260 = vst.msk [vmem:[%s190] sm:$0xff] %vm259, %v258
        %v261 = vmul.f32 %v256, %v219
        %v262 = vsub.f32 %v261, 1.0
        %s263 = scalar_lea.vmem %s190, 8 [#allocation7]
        %264 = vst.msk [vmem:[%s263] sm:$0xff] %vm259, %v262
        %s265 = sand.u32 %s91, 1
        %s266 = scalar_lea.sflag [#allocation4], %s265
        %s267 = sand.u32 %s91, 1
        %s268 = smul.addr %s267, 16
        %s269 = scalar_lea.vmem [#allocation7], %s268
        // Predicated region
        $region37: #{tpu_custom_call.1} parent=27 // pred_check
          %p270 = pneg %p101
        $region38: #{tpu_custom_call.1} parent=27 // pred_check_branch
          %272 = sbr.rel (%p270) target = $region40
        $region39: #{tpu_custom_call.1} parent=27 // pred_region
          %s274 = ssub.s32 256, 256
          %275 = vsyncadd %s266, %s274
          %s276 = smul.addr %s24, 2
          %s277 = sadd.s32 %s25, %s276
          %s278 = smul.addr %s277, 128
          %s279 = scalar_lea.hbm %s2, %s278
          %s280 = sshll.u32 %s269, 4
          %s281 = int_to_ptr.vmem [resolvable:$true] %s280
          %286 = dma.vmem_to_hbm [thread:$0]  %s281, 256, %s279, %s266, 128, 128, 8
        $region40: #{tpu_custom_call.1} parent=27 // pred_fallthru
          _
      $region28: #{tpu_custom_call.1} parent=5 // pred_fallthru
        _
      %p287 = scmp.le.s32.totalorder 2, %s15
      // Predicated region
      $region41: #{tpu_custom_call.1} parent=5 // pred_check
        %p288 = pneg %p287
      $region42: #{tpu_custom_call.1} parent=5 // pred_check_branch
        %290 = sbr.rel (%p288) target = $region44
      $region43: #{tpu_custom_call.1} parent=5 // pred_region
        %s291 = ssub.s32 %s15, 2
        // Predicated region
        $region45: #{tpu_custom_call.1} parent=43 // pred_check
          %p292 = pneg %p107
        $region46: #{tpu_custom_call.1} parent=43 // pred_check_branch
          %294 = sbr.rel (%p292) target = $region48
        $region47: #{tpu_custom_call.1} parent=43 // pred_region
          %s295 = sand.u32 %s92, 1
          %s296 = scalar_lea.sflag [#allocation4], %s295
          %s297 = sand.u32 %s92, 1
          %s298 = smul.addr %s297, 16
          %s299 = scalar_lea.vmem [#allocation7], %s298
          %300 = dma.done %s296, 256
        $region48: #{tpu_custom_call.1} parent=43 // pred_fallthru
          _
      $region44: #{tpu_custom_call.1} parent=5 // pred_fallthru
        _
    $region6: #{tpu_custom_call.1} parent=1 // loop_footer
      %s19 = sadd.s32 1, %s15
    $region7: #{tpu_custom_call.1} parent=1 // loop_footer_branch
      %14 = sbr.rel target = $region3
    $region8: #{tpu_custom_call.1} parent=1 // loop_exit
      _
    %301 = vsyncpa [#allocation3], 1
    %s302 = scalar_lea.sflag [#allocation3], 1
    %303 = vsyncpa %s302, 1
    %304 = vsyncpa [#allocation4], 1
    %s305 = scalar_lea.sflag [#allocation4], 1
    %306 = vsyncpa %s305, 1
    %307 = vsyncpa [#allocation5], 1
    %s308 = scalar_lea.sflag [#allocation5], 1
    %309 = vsyncpa %s308, 1

</llo_original>
